<compile_context>
chip_gen: v7x
topology: tpu7x:2x2x1
jax: 0.10.0
libtpu: 0.0.40
codegen_flags: <defaults>
</compile_context>

<pallas_src>
import functools

import jax
import jax.numpy as jnp
from jax.experimental import pallas as pl
from jax.experimental.pallas import tpu as pltpu


def _add_stats_kernel(x_ref, y_ref, o_ref, mn_ref, mx_ref):
    """Element-wise add of one (tr, C) tile + running global min/max in SMEM."""
    i = pl.program_id(0)

    out = x_ref[...] + y_ref[...]
    o_ref[...] = out

    tile_min = jnp.min(out).astype(jnp.float32)
    tile_max = jnp.max(out).astype(jnp.float32)

    @pl.when(i == 0)
    def _():
        mn_ref[0] = tile_min
        mx_ref[0] = tile_max

    @pl.when(i > 0)
    def _():
        mn_ref[0] = jnp.minimum(mn_ref[0], tile_min)
        mx_ref[0] = jnp.maximum(mx_ref[0], tile_max)


def _round_up(a, b):
    return ((a + b - 1) // b) * b


def pallas_quantized_add(x, y, *, lane_width=512, max_rows_per_tile=512):
    """Returns (x + y, global_min(out), global_max(out)) with the reduction
    fused into the add kernel (no second HBM pass over the output)."""
    # Match torch's broadcasting / dtype-promotion semantics for `x + y`.
    out_dtype = jnp.result_type(x.dtype, y.dtype)
    x, y = jnp.broadcast_arrays(x.astype(out_dtype), y.astype(out_dtype))
    orig_shape = x.shape
    n = x.size

    C = lane_width                      # lane-dense last dim (multiple of 128)
    chunk = 8 * C                       # (8, 128)-tile granularity
    n_pad = _round_up(max(n, 1), chunk)
    R = n_pad // C
    if R <= max_rows_per_tile:
        tr = R                          # single row-block == full dim (allowed)
    else:
        tr = max_rows_per_tile          # multiple of 8
        R = _round_up(R, tr)
        n_pad = R * C

    def _flat_pad(a):
        a = a.reshape(-1)
        if n_pad != n:
            # Zero padding is harmless for the stats: the module clamps
            # min <= -eps and max >= +eps with eps=1e-6 right after.
            a = jnp.pad(a, (0, n_pad - n))
        return a.reshape(R, C)

    x2 = _flat_pad(x)
    y2 = _flat_pad(y)

    grid = (R // tr,)
    out2, out_min, out_max = pl.pallas_call(
        _add_stats_kernel,
        out_shape=(
            jax.ShapeDtypeStruct((R, C), out_dtype),
            jax.ShapeDtypeStruct((1,), jnp.float32),
            jax.ShapeDtypeStruct((1,), jnp.float32),
        ),
        grid_spec=pl.GridSpec(
            grid=grid,
            in_specs=[
                pl.BlockSpec((tr, C), lambda i: (i, 0)),
                pl.BlockSpec((tr, C), lambda i: (i, 0)),
            ],
            out_specs=(
                pl.BlockSpec((tr, C), lambda i: (i, 0)),
                pl.BlockSpec(memory_space=pltpu.MemorySpace.SMEM),
                pl.BlockSpec(memory_space=pltpu.MemorySpace.SMEM),
            ),
        ),
        compiler_params=pltpu.CompilerParams(
            # The min/max outputs accumulate across the grid axis -> sequential.
            dimension_semantics=("arbitrary",),
        ),
    )(x2, y2)

    output = out2.reshape(-1)[:n].reshape(orig_shape)
    return output, out_min[0], out_max[0]


@functools.partial(jax.jit, static_argnames=("training", "momentum"))
def quantized_add_forward(
    x,
    y,
    running_min,
    running_max,
    num_batches_tracked,
    *,
    training=True,
    momentum=0.1,
):
    """Functional equivalent of QuantizedAdd.forward with
    activation_quantization=False.  Returns (output, new_buffers)."""
    output, out_min, out_max = pallas_quantized_add(x, y)

    if not training:
        return output, (running_min, running_max, num_batches_tracked)

    # update_min_max_stats (tiny scalar bookkeeping in plain JAX)
    eps = jnp.float32(1e-6)
    mn = jnp.minimum(-eps, out_min)
    mx = jnp.maximum(eps, out_max)

    first = num_batches_tracked == 0
    new_min = jnp.where(
        first, mn, mn * momentum + running_min[0] * (1.0 - momentum)
    ).reshape(1)
    new_max = jnp.where(
        first, mx, mx * momentum + running_max[0] * (1.0 - momentum)
    ).reshape(1)
    new_nbt = num_batches_tracked + 1
    return output, (new_min, new_max, new_nbt)


if __name__ == "__main__":
    key = jax.random.PRNGKey(0)
    kx, ky, kx2, ky2 = jax.random.split(key, 4)

    # Small demo shape consistent with an element-wise (residual) add.
    shape = (2, 4, 16, 16)
    x = jax.random.normal(kx, shape, dtype=jnp.float32)
    y = jax.random.normal(ky, shape, dtype=jnp.float32)

    running_min = jnp.zeros((1,), jnp.float32)
    running_max = jnp.zeros((1,), jnp.float32)
    num_batches_tracked = jnp.array(0, jnp.int32)

    out, (new_min, new_max, new_nbt) = quantized_add_forward(
        x, y, running_min, running_max, num_batches_tracked,
        training=True, momentum=0.1,
    )
    jax.block_until_ready(out)

    # Silent correctness checks against a pure-JAX reference.
    ref = x + y
    eps = 1e-6
    ref_min = jnp.minimum(jnp.float32(-eps), ref.min().astype(jnp.float32))
    ref_max = jnp.maximum(jnp.float32(eps), ref.max().astype(jnp.float32))
    assert out.shape == shape
    assert jnp.allclose(out, ref, atol=1e-6, rtol=1e-6)
    assert jnp.allclose(new_min[0], ref_min, atol=1e-6, rtol=1e-6)
    assert jnp.allclose(new_max[0], ref_max, atol=1e-6, rtol=1e-6)
    assert int(new_nbt) == 1

    # Second, larger case that exercises the multi-tile grid (>1 row block)
    # and the EMA (num_batches_tracked > 0) path.
    shape2 = (8, 16, 64, 64)  # 524288 elems -> 2 row tiles of (512, 512)
    x2 = jax.random.normal(kx2, shape2, dtype=jnp.float32)
    y2 = jax.random.normal(ky2, shape2, dtype=jnp.float32)
    out2, (min2, max2, nbt2) = quantized_add_forward(
        x2, y2, new_min, new_max, new_nbt, training=True, momentum=0.1,
    )
    jax.block_until_ready(out2)

    ref2 = x2 + y2
    m2 = jnp.minimum(jnp.float32(-eps), ref2.min().astype(jnp.float32))
    M2 = jnp.maximum(jnp.float32(eps), ref2.max().astype(jnp.float32))
    exp_min2 = m2 * 0.1 + new_min[0] * 0.9
    exp_max2 = M2 * 0.1 + new_max[0] * 0.9
    assert jnp.allclose(out2, ref2, atol=1e-6, rtol=1e-6)
    assert jnp.allclose(min2[0], exp_min2, atol=1e-5, rtol=1e-5)
    assert jnp.allclose(max2[0], exp_max2, atol=1e-5, rtol=1e-5)
    assert int(nbt2) == 2

    print("KERNEL_OK")
</pallas_src>

<mosaic_0001>
module attributes {stable_mosaic.version = 11 : i64} {
  func.func @_add_stats_kernel(%arg0: i32, %arg1: memref<8x512xf32, #tpu.memory_space<vmem>>, %arg2: memref<8x512xf32, #tpu.memory_space<vmem>>, %arg3: memref<8x512xf32, #tpu.memory_space<vmem>>, %arg4: memref<1xf32, #tpu.memory_space<smem>>, %arg5: memref<1xf32, #tpu.memory_space<smem>>) attributes {dimension_semantics = [#tpu.dimension_semantics<arbitrary>], iteration_bounds = array<i64: 1>, scalar_prefetch = 0 : i64, scratch_operands = 0 : i64, tpu.core_type = #tpu.core_type<tc>, window_params = [{transform_indices = @transform_0, window_bounds = array<i64: 8, 512>}, {transform_indices = @transform_1, window_bounds = array<i64: 8, 512>}, {transform_indices = @transform_2, window_bounds = array<i64: 8, 512>}, {transform_indices = @transform_3, window_bounds = array<i64: 1>}, {transform_indices = @transform_4, window_bounds = array<i64: 1>}]} {
    %c0 = arith.constant 0 : index
    %c0_0 = arith.constant 0 : index
    %0 = vector.load %arg1[%c0, %c0_0] : memref<8x512xf32, #tpu.memory_space<vmem>>, vector<8x512xf32>
    %c0_1 = arith.constant 0 : index
    %c0_2 = arith.constant 0 : index
    %1 = vector.load %arg2[%c0_1, %c0_2] : memref<8x512xf32, #tpu.memory_space<vmem>>, vector<8x512xf32>
    %2 = arith.addf %0, %1 : vector<8x512xf32>
    %c0_3 = arith.constant 0 : index
    %c0_4 = arith.constant 0 : index
    %3 = vector.load %arg3[%c0_3, %c0_4] : memref<8x512xf32, #tpu.memory_space<vmem>>, vector<8x512xf32>
    tpu.vector_store %arg3[%c0_3, %c0_4], %2 {strides = array<i32>} : memref<8x512xf32, #tpu.memory_space<vmem>>, vector<8x512xf32>,
    %4 = vector.shape_cast %2 : vector<8x512xf32> to vector<1x8x512xf32>
    %cst = arith.constant dense<0x7F800000> : vector<1xf32>
    %5 = vector.multi_reduction <minimumf>, %4, %cst [1, 2] : vector<1x8x512xf32> to vector<1xf32>
    %6 = vector.shape_cast %5 : vector<1xf32> to vector<1x1x1xf32>
    %7 = vector.extract %6[0, 0, 0] : f32 from vector<1x1x1xf32>
    %8 = vector.shape_cast %2 : vector<8x512xf32> to vector<1x8x512xf32>
    %cst_5 = arith.constant dense<0xFF800000> : vector<1xf32>
    %9 = vector.multi_reduction <maximumf>, %8, %cst_5 [1, 2] : vector<1x8x512xf32> to vector<1xf32>
    %10 = vector.shape_cast %9 : vector<1xf32> to vector<1x1x1xf32>
    %11 = vector.extract %10[0, 0, 0] : f32 from vector<1x1x1xf32>
    %c0_i32 = arith.constant 0 : i32
    %12 = arith.cmpi eq, %arg0, %c0_i32 : i32
    %13 = arith.extui %12 : i1 to i32
    %c0_i32_6 = arith.constant 0 : i32
    %14 = arith.cmpi ne, %13, %c0_i32_6 : i32
    scf.if %14 {
      %c0_9 = arith.constant 0 : index
      %18 = memref.load %arg4[%c0_9] : memref<1xf32, #tpu.memory_space<smem>>
      memref.store %7, %arg4[%c0_9] : memref<1xf32, #tpu.memory_space<smem>>
      %c0_10 = arith.constant 0 : index
      %19 = memref.load %arg5[%c0_10] : memref<1xf32, #tpu.memory_space<smem>>
      memref.store %11, %arg5[%c0_10] : memref<1xf32, #tpu.memory_space<smem>>
    } else {
    }
    %c0_i32_7 = arith.constant 0 : i32
    %15 = arith.cmpi sgt, %arg0, %c0_i32_7 : i32
    %16 = arith.extui %15 : i1 to i32
    %c0_i32_8 = arith.constant 0 : i32
    %17 = arith.cmpi ne, %16, %c0_i32_8 : i32
    scf.if %17 {
      %c0_9 = arith.constant 0 : index
      %18 = memref.load %arg4[%c0_9] : memref<1xf32, #tpu.memory_space<smem>>
      %19 = arith.minimumf %18, %7 : f32
      %c0_10 = arith.constant 0 : index
      %20 = memref.load %arg4[%c0_10] : memref<1xf32, #tpu.memory_space<smem>>
      memref.store %19, %arg4[%c0_10] : memref<1xf32, #tpu.memory_space<smem>>
      %c0_11 = arith.constant 0 : index
      %21 = memref.load %arg5[%c0_11] : memref<1xf32, #tpu.memory_space<smem>>
      %22 = arith.maximumf %21, %11 : f32
      %c0_12 = arith.constant 0 : index
      %23 = memref.load %arg5[%c0_12] : memref<1xf32, #tpu.memory_space<smem>>
      memref.store %22, %arg5[%c0_12] : memref<1xf32, #tpu.memory_space<smem>>
    } else {
    }
    return
  }
  func.func @transform_0(%arg0: i32) -> (i32, i32) {
    %c0_i32 = arith.constant 0 : i32
    %c0_i32_0 = arith.constant 0 : i32
    return %arg0, %c0_i32 : i32, i32
  }
  func.func @transform_1(%arg0: i32) -> (i32, i32) {
    %c0_i32 = arith.constant 0 : i32
    %c0_i32_0 = arith.constant 0 : i32
    return %arg0, %c0_i32 : i32, i32
  }
  func.func @transform_2(%arg0: i32) -> (i32, i32) {
    %c0_i32 = arith.constant 0 : i32
    %c0_i32_0 = arith.constant 0 : i32
    return %arg0, %c0_i32 : i32, i32
  }
  func.func @transform_3(%arg0: i32) -> i32 {
    %c0_i32 = arith.constant 0 : i32
    %c0_i32_0 = arith.constant 0 : i32
    return %c0_i32 : i32
  }
  func.func @transform_4(%arg0: i32) -> i32 {
    %c0_i32 = arith.constant 0 : i32
    %c0_i32_0 = arith.constant 0 : i32
    return %c0_i32 : i32
  }
}

</mosaic_0001>

<llo_original>
// kernel: quantized_add_forward.1
$region0: #{quantized_add_forward.1}
  #allocation0 [shape = 'u32[]', space=smem, size = 0x4, offset = 0x4, fixed_abs, tag = 'smem constant byte address 0x4 - core index']
  #allocation1 [shape = 'u32[144,128]{1,0:T(1,128)}', space=vmem, size = 0x12000, scoped, tag = 'internal scratch']
  %s0 = inlined_call_operand.vmem [shape: f32[8,512], index: 0, kind: input, shape index: {}]
  %s1 = inlined_call_operand.vmem [shape: f32[8,512], index: 1, kind: input, shape index: {}]
  %s2 = inlined_call_operand.vmem [shape: f32[8,512], index: 2, kind: output, shape index: {0}]
  %s3 = inlined_call_operand.hbm [shape: f32[1], index: 3, kind: output, shape index: {1}]
  %s4 = inlined_call_operand.hbm [shape: f32[1], index: 4, kind: output, shape index: {2}]
  %5 = xla_tuple %s2, %s3, %s4
  %s6 = sld [smem:[#allocation0]]
  $region42: #{quantized_add_forward.1} parent=0
    _
  %s8 = ssub.s32 1, %s6
  %s9 = scalar_select 0, %s8, %s6
  $region1: #{quantized_add_forward.1} parent=0
    #allocation2 [shape = 'u8[512]{0}', space=smem, size = 0x200, scoped, tag = 'output window, operand 1, single buffered']
    #allocation3 [shape = 's32[1]{0}', space=sflag, size = 0x4, scoped, tag = 'scoped memory for quantized_add_forward.1']
    #allocation4 [shape = 'u8[512]{0}', space=smem, size = 0x200, scoped, tag = 'output window, operand 2, single buffered']
    #allocation5 [shape = 's32[1]{0}', space=sflag, size = 0x4, scoped, tag = 'scoped memory for quantized_add_forward.1']
    %10 = vsyncpa [#allocation3], 0
    %11 = vsyncpa [#allocation5], 0
    // Predicated region
    $region2: #{quantized_add_forward.1} parent=1 // pred_check
      _
    $region3: #{quantized_add_forward.1} parent=1 // pred_check_branch
      %13 = sbr.rel (0) target = $region5
    $region4: #{quantized_add_forward.1} parent=1 // pred_region
      _
    $region5: #{quantized_add_forward.1} parent=1 // pred_fallthru
      _
    // Predicated region
    $region6: #{quantized_add_forward.1} parent=1 // pred_check
      _
    $region7: #{quantized_add_forward.1} parent=1 // pred_check_branch
      %15 = sbr.rel (0) target = $region9
    $region8: #{quantized_add_forward.1} parent=1 // pred_region
      _
    $region9: #{quantized_add_forward.1} parent=1 // pred_fallthru
      _
    %v16 = vld [vmem:[%s0] sm:$0xff]
    %v17 = vld [vmem:[%s0 + $0x8] sm:$0xff]
    %v18 = vld [vmem:[%s0 + $0x10] sm:$0xff]
    %v19 = vld [vmem:[%s0 + $0x18] sm:$0xff]
    %v20 = vld [vmem:[%s1] sm:$0xff]
    %v21 = vld [vmem:[%s1 + $0x8] sm:$0xff]
    %v22 = vld [vmem:[%s1 + $0x10] sm:$0xff]
    %v23 = vld [vmem:[%s1 + $0x18] sm:$0xff]
    %v24 = vadd.f32 %v16, %v20
    %v25 = vadd.f32 %v17, %v21
    %v26 = vadd.f32 %v18, %v22
    %v27 = vadd.f32 %v19, %v23
    %28 = vst [vmem:[%s2] sm:$0xff] %v24
    %29 = vst [vmem:[%s2 + $0x8] sm:$0xff] %v25
    %30 = vst [vmem:[%s2 + $0x10] sm:$0xff] %v26
    %31 = vst [vmem:[%s2 + $0x18] sm:$0xff] %v27
    %v32 = vmin.f32 %v24, %v25
    %v33 = vmin.f32 %v26, %v27
    %v34 = vmin.f32 %v32, %v33
    %35 = vmin.xlane.f32.xlu0 %v34
    %v36 = vpop.xlane.xlu0 %35
    %v37 = vrot.slane %v36, 4
    %v38 = vmin.f32 %v36, %v37
    %v39 = vrot.slane %v38, 2
    %v40 = vmin.f32 %v38, %v39
    %v41 = vrot.slane %v40, 1
    %v42 = vmin.f32 %v40, %v41
    %s43 = vtos %v42
    %v44 = vmax.f32 %v24, %v25
    %v45 = vmax.f32 %v26, %v27
    %v46 = vmax.f32 %v44, %v45
    %47 = vmax.xlane.f32.xlu0 %v46
    %v48 = vpop.xlane.xlu0 %47
    %v49 = vrot.slane %v48, 4
    %v50 = vmax.f32 %v48, %v49
    %v51 = vrot.slane %v50, 2
    %v52 = vmax.f32 %v50, %v51
    %v53 = vrot.slane %v52, 1
    %v54 = vmax.f32 %v52, %v53
    %s55 = vtos %v54
    %p56 = scmp.eq.s32.totalorder 0, 0
    // Predicated region
    $region10: #{quantized_add_forward.1} parent=1 // pred_check
      %p57 = pneg %p56
    $region11: #{quantized_add_forward.1} parent=1 // pred_check_branch
      %59 = sbr.rel (%p57) target = $region13
    $region12: #{quantized_add_forward.1} parent=1 // pred_region
      %s60 = scalar_lea.smem [#allocation2], 0
      %61 = sst [smem:[%s60]] %s43
      %s62 = scalar_lea.smem [#allocation4], 0
      %63 = sst [smem:[%s62]] %s55
    $region13: #{quantized_add_forward.1} parent=1 // pred_fallthru
      _
    %p64 = scmp.gt.s32.totalorder 0, 0
    // Predicated region
    $region14: #{quantized_add_forward.1} parent=1 // pred_check
      %p65 = pneg %p64
    $region15: #{quantized_add_forward.1} parent=1 // pred_check_branch
      %67 = sbr.rel (%p65) target = $region17
    $region16: #{quantized_add_forward.1} parent=1 // pred_region
      %s68 = sld [smem:[#allocation2]]
      %s69 = smin.f32 %s68, %s43
      %s70 = scalar_lea.smem [#allocation2], 0
      %71 = sst [smem:[%s70]] %s69
      %s72 = sld [smem:[#allocation4]]
      %s73 = smax.f32 %s72, %s55
      %s74 = scalar_lea.smem [#allocation4], 0
      %75 = sst [smem:[%s74]] %s73
    $region17: #{quantized_add_forward.1} parent=1 // pred_fallthru
      _
    // Predicated region
    $region18: #{quantized_add_forward.1} parent=1 // pred_check
      _
    $region19: #{quantized_add_forward.1} parent=1 // pred_check_branch
      %77 = sbr.rel (0) target = $region21
    $region20: #{quantized_add_forward.1} parent=1 // pred_region
      _
    $region21: #{quantized_add_forward.1} parent=1 // pred_fallthru
      _
    // Predicated region
    $region22: #{quantized_add_forward.1} parent=1 // pred_check
      _
    $region23: #{quantized_add_forward.1} parent=1 // pred_check_branch
      %79 = sbr.rel (0) target = $region25
    $region24: #{quantized_add_forward.1} parent=1 // pred_region
      %s81 = ssub.s32 16, 16
      %82 = vsyncadd [#allocation3], %s81
      %85 = dma.smem_to_hbm [#allocation2], 16, %s3, [#allocation3]
    $region25: #{quantized_add_forward.1} parent=1 // pred_fallthru
      _
    // Predicated region
    $region26: #{quantized_add_forward.1} parent=1 // pred_check
      _
    $region27: #{quantized_add_forward.1} parent=1 // pred_check_branch
      %87 = sbr.rel (0) target = $region29
    $region28: #{quantized_add_forward.1} parent=1 // pred_region
      %s89 = ssub.s32 16, 16
      %90 = vsyncadd [#allocation5], %s89
      %93 = dma.smem_to_hbm [#allocation4], 16, %s4, [#allocation5]
    $region29: #{quantized_add_forward.1} parent=1 // pred_fallthru
      _
    // Predicated region
    $region30: #{quantized_add_forward.1} parent=1 // pred_check
      _
    $region31: #{quantized_add_forward.1} parent=1 // pred_check_branch
      %95 = sbr.rel (0) target = $region33
    $region32: #{quantized_add_forward.1} parent=1 // pred_region
      _
    $region33: #{quantized_add_forward.1} parent=1 // pred_fallthru
      _
    // Predicated region
    $region34: #{quantized_add_forward.1} parent=1 // pred_check
      _
    $region35: #{quantized_add_forward.1} parent=1 // pred_check_branch
      %97 = sbr.rel (0) target = $region37
    $region36: #{quantized_add_forward.1} parent=1 // pred_region
      %98 = dma.done [#allocation3], 16
    $region37: #{quantized_add_forward.1} parent=1 // pred_fallthru
      _
    // Predicated region
    $region38: #{quantized_add_forward.1} parent=1 // pred_check
      _
    $region39: #{quantized_add_forward.1} parent=1 // pred_check_branch
      %100 = sbr.rel (0) target = $region41
    $region40: #{quantized_add_forward.1} parent=1 // pred_region
      %101 = dma.done [#allocation5], 16
    $region41: #{quantized_add_forward.1} parent=1 // pred_fallthru
      _
    %102 = sfence
    %103 = vsyncpa [#allocation3], 1
    %104 = vsyncpa [#allocation5], 1

</llo_original>
